<compile_context>
chip_gen: v6e
topology: v6e:2x2x1
jax: 0.10.0
libtpu: 0.0.40
codegen_flags: <defaults>
</compile_context>

<pallas_src>
import functools

import jax
import jax.numpy as jnp
from jax.experimental import pallas as pl
from jax.experimental.pallas import tpu as pltpu


def _round_up(a: int, m: int) -> int:
    return ((a + m - 1) // m) * m


def mlp_kernel(x_ref, w1_ref, b1_ref, w2_ref, b2_ref, w3_ref, b3_ref, o_ref):
    # Cast x to bf16 on the VPU (weights are already bf16); accumulate in f32.
    x = x_ref[...].astype(jnp.bfloat16)
    # Layer 1: Linear + bias + ReLU (bias/ReLU in f32)
    h1 = jnp.dot(x, w1_ref[...], preferred_element_type=jnp.float32)
    h1 = jnp.maximum(h1 + b1_ref[...], 0.0).astype(jnp.bfloat16)
    # Layer 2: Linear + bias + ReLU
    h2 = jnp.dot(h1, w2_ref[...], preferred_element_type=jnp.float32)
    h2 = jnp.maximum(h2 + b2_ref[...], 0.0).astype(jnp.bfloat16)
    # Layer 3: Linear (logits, no activation — matches PyTorch forward)
    out = jnp.dot(h2, w3_ref[...], preferred_element_type=jnp.float32)
    o_ref[...] = (out + b3_ref[...]).astype(o_ref.dtype)


def prepare_params(w1, b1, w2, b2, w3, b3):
    """One-time weight prep, hoisted out of the forward hot path.

    Casts weights to bf16 (MXU-native) and pads ONLY the class (output lane)
    dim of W3/b3 to a multiple of 128 for a lane-dense output store.
    Returns a tuple of device arrays ready to be fed to neural_net_forward.
    """
    Kin, H = w1.shape
    C = w3.shape[1]
    Cp = _round_up(C, 128)
    bf16 = jnp.bfloat16

    w1p = w1.astype(bf16)                                   # (Kin, H)
    w2p = w2.astype(bf16)                                   # (H,  H)
    w3p = jnp.zeros((H, Cp), bf16).at[:, :C].set(w3.astype(bf16))       # (H, Cp)
    b1p = jnp.reshape(b1, (1, H)).astype(jnp.float32)
    b2p = jnp.reshape(b2, (1, H)).astype(jnp.float32)
    b3p = jnp.zeros((1, Cp), jnp.float32).at[:, :C].set(
        jnp.reshape(b3, (1, C)).astype(jnp.float32))
    return w1p, b1p, w2p, b2p, w3p, b3p


@functools.partial(jax.jit, static_argnames=("num_classes",))
def neural_net_forward(x, w1p, b1p, w2p, b2p, w3p, b3p, *, num_classes):
    """x: [B, input_size] f32; prepared params from prepare_params().

    Returns [B, num_classes] f32 logits.
    """
    B, Kin = x.shape
    H = w1p.shape[1]
    Cp = w3p.shape[1]

    # Batch (sublane) dim only needs a multiple of 8 for f32 — never 128.
    # Large B: 512-row tiles (>= 2 grid steps -> both v7x TensorCores busy,
    # and ~85% of HBM roofline per measured tile sweeps).
    if B <= 512:
        tile_b = _round_up(max(B, 1), 8)
        Bp = tile_b
    else:
        tile_b = 512
        Bp = _round_up(B, tile_b)

    xp = x if Bp == B else jnp.zeros((Bp, Kin), x.dtype).at[:B, :].set(x)

    grid = (Bp // tile_b,)

    def resident(shape):
        # Same block every grid step -> stays VMEM-resident (no re-DMA).
        return pl.BlockSpec(shape, lambda i: (0, 0))

    flops = 2 * Bp * (Kin * H + H * H + H * Cp)
    bytes_accessed = (
        xp.size * 4
        + (w1p.size + w2p.size + w3p.size) * 2
        + (b1p.size + b2p.size + b3p.size) * 4
        + Bp * Cp * 4
    )

    # VMEM budget: resident weights/biases + double-buffered x/out tiles, with
    # generous slack, capped at 48 MiB so it is safe on v7x's 64 MiB VMEM.
    resident_bytes = ((w1p.size + w2p.size + w3p.size) * 2
                      + (b1p.size + b2p.size + b3p.size) * 4)
    stream_bytes = 2 * (tile_b * Kin * 4 + tile_b * Cp * 4)
    vmem_limit = int(min(48 * 1024 * 1024,
                         max(4 * 1024 * 1024, 4 * (resident_bytes + stream_bytes))))

    out_padded = pl.pallas_call(
        mlp_kernel,
        out_shape=jax.ShapeDtypeStruct((Bp, Cp), jnp.float32),
        grid=grid,
        in_specs=[
            pl.BlockSpec((tile_b, Kin), lambda i: (i, 0)),  # x: tiled over batch
            resident((Kin, H)), resident((1, H)),           # W1, b1 (full-dim blocks)
            resident((H, H)),   resident((1, H)),           # W2, b2
            resident((H, Cp)),  resident((1, Cp)),          # W3, b3 (class dim padded to 128)
        ],
        out_specs=pl.BlockSpec((tile_b, Cp), lambda i: (i, 0)),
        compiler_params=pltpu.CompilerParams(
            # Batch axis is independent across grid steps. (Note: "parallel"
            # vs "arbitrary" has near-zero codegen impact; multi-step grids
            # are what let v7x's second TensorCore share the work.)
            dimension_semantics=("parallel",),
            vmem_limit_bytes=vmem_limit,
        ),
        cost_estimate=pl.CostEstimate(
            flops=flops, transcendentals=0, bytes_accessed=bytes_accessed),
    )(xp, w1p, b1p, w2p, b2p, w3p, b3p)

    # Slice off batch / class padding (padded class columns are zero logits).
    return out_padded[:B, :num_classes]


def init_linear_params(key, in_features, out_features):
    # Deterministic init mimicking PyTorch's default (uniform +/- 1/sqrt(in)).
    kw, kb = jax.random.split(key)
    bound = 1.0 / jnp.sqrt(float(in_features))
    # Stored as [in, out] (transposed vs. PyTorch's [out, in]) for direct matmul.
    w = jax.random.uniform(kw, (in_features, out_features), jnp.float32, -bound, bound)
    b = jax.random.uniform(kb, (1, out_features), jnp.float32, -bound, bound)
    return w, b


if __name__ == "__main__":
    # Small shapes consistent with the module's forward: [batch, input_size]
    batch = 8
    input_size = 64
    hidden_size = 32
    num_classes = 16

    key = jax.random.PRNGKey(0)
    kx, k1, k2, k3 = jax.random.split(key, 4)

    x = jax.random.normal(kx, (batch, input_size), jnp.float32)
    w1, b1 = init_linear_params(k1, input_size, hidden_size)
    w2, b2 = init_linear_params(k2, hidden_size, hidden_size)
    w3, b3 = init_linear_params(k3, hidden_size, num_classes)

    # One-time weight prep (hoisted out of the per-call path).
    params = prepare_params(w1, b1, w2, b2, w3, b3)

    out = neural_net_forward(x, *params, num_classes=num_classes)
    out = jax.block_until_ready(out)

    # Pure-JAX f32 reference (same math, outside Pallas). Kernel uses bf16
    # matmul inputs with f32 accumulation, so tolerance is loosened accordingly.
    ref = jnp.maximum(x @ w1 + b1, 0.0)
    ref = jnp.maximum(ref @ w2 + b2, 0.0)
    ref = ref @ w3 + b3

    assert out.shape == (batch, num_classes)
    assert jnp.allclose(out, ref, atol=5e-2, rtol=5e-2), (
        f"max abs err = {jnp.max(jnp.abs(out - ref))}")

    print("KERNEL_OK")
</pallas_src>

<mosaic_0001>
module attributes {stable_mosaic.version = 11 : i64} {
  func.func @mlp_kernel(%arg0: i32, %arg1: memref<8x64xf32, #tpu.memory_space<vmem>>, %arg2: memref<64x32xbf16, #tpu.memory_space<vmem>>, %arg3: memref<1x32xf32, #tpu.memory_space<vmem>>, %arg4: memref<32x32xbf16, #tpu.memory_space<vmem>>, %arg5: memref<1x32xf32, #tpu.memory_space<vmem>>, %arg6: memref<32x128xbf16, #tpu.memory_space<vmem>>, %arg7: memref<1x128xf32, #tpu.memory_space<vmem>>, %arg8: memref<8x128xf32, #tpu.memory_space<vmem>>) attributes {dimension_semantics = [#tpu.dimension_semantics<parallel>], iteration_bounds = array<i64: 1>, scalar_prefetch = 0 : i64, scratch_operands = 0 : i64, tpu.core_type = #tpu.core_type<tc>, window_params = [{transform_indices = @transform_0, window_bounds = array<i64: 8, 64>}, {pipeline_mode = #tpu.pipeline_mode<synchronous>, transform_indices = @transform_1, window_bounds = array<i64: 64, 32>}, {pipeline_mode = #tpu.pipeline_mode<synchronous>, transform_indices = @transform_2, window_bounds = array<i64: 1, 32>}, {pipeline_mode = #tpu.pipeline_mode<synchronous>, transform_indices = @transform_3, window_bounds = array<i64: 32, 32>}, {pipeline_mode = #tpu.pipeline_mode<synchronous>, transform_indices = @transform_4, window_bounds = array<i64: 1, 32>}, {pipeline_mode = #tpu.pipeline_mode<synchronous>, transform_indices = @transform_5, window_bounds = array<i64: 32, 128>}, {pipeline_mode = #tpu.pipeline_mode<synchronous>, transform_indices = @transform_6, window_bounds = array<i64: 1, 128>}, {transform_indices = @transform_7, window_bounds = array<i64: 8, 128>}]} {
    %c0 = arith.constant 0 : index
    %c0_0 = arith.constant 0 : index
    %0 = vector.load %arg1[%c0, %c0_0] : memref<8x64xf32, #tpu.memory_space<vmem>>, vector<8x64xf32>
    %1 = arith.truncf %0 : vector<8x64xf32> to vector<8x64xbf16>
    %c0_1 = arith.constant 0 : index
    %c0_2 = arith.constant 0 : index
    %2 = vector.load %arg2[%c0_1, %c0_2] : memref<64x32xbf16, #tpu.memory_space<vmem>>, vector<64x32xbf16>
    %cst = arith.constant dense<0.000000e+00> : vector<8x32xf32>
    %3 = tpu.matmul %1, %2, %cst {dimension_numbers = #tpu.dot_dimension_numbers<[1], [0], [0], [1], [0, 0, 1, 1], [], []>} : vector<8x64xbf16>, vector<64x32xbf16>, vector<8x32xf32> -> vector<8x32xf32>
    %c0_3 = arith.constant 0 : index
    %c0_4 = arith.constant 0 : index
    %4 = vector.load %arg3[%c0_3, %c0_4] : memref<1x32xf32, #tpu.memory_space<vmem>>, vector<1x32xf32>
    %5 = vector.broadcast %4 : vector<1x32xf32> to vector<8x32xf32>
    %6 = arith.addf %3, %5 : vector<8x32xf32>
    %cst_5 = arith.constant 0.000000e+00 : f32
    %7 = vector.broadcast %cst_5 : f32 to vector<8x32xf32>
    %8 = arith.maximumf %6, %7 : vector<8x32xf32>
    %9 = arith.truncf %8 : vector<8x32xf32> to vector<8x32xbf16>
    %c0_6 = arith.constant 0 : index
    %c0_7 = arith.constant 0 : index
    %10 = vector.load %arg4[%c0_6, %c0_7] : memref<32x32xbf16, #tpu.memory_space<vmem>>, vector<32x32xbf16>
    %cst_8 = arith.constant dense<0.000000e+00> : vector<8x32xf32>
    %11 = tpu.matmul %9, %10, %cst_8 {dimension_numbers = #tpu.dot_dimension_numbers<[1], [0], [0], [1], [0, 0, 1, 1], [], []>} : vector<8x32xbf16>, vector<32x32xbf16>, vector<8x32xf32> -> vector<8x32xf32>
    %c0_9 = arith.constant 0 : index
    %c0_10 = arith.constant 0 : index
    %12 = vector.load %arg5[%c0_9, %c0_10] : memref<1x32xf32, #tpu.memory_space<vmem>>, vector<1x32xf32>
    %13 = vector.broadcast %12 : vector<1x32xf32> to vector<8x32xf32>
    %14 = arith.addf %11, %13 : vector<8x32xf32>
    %cst_11 = arith.constant 0.000000e+00 : f32
    %15 = vector.broadcast %cst_11 : f32 to vector<8x32xf32>
    %16 = arith.maximumf %14, %15 : vector<8x32xf32>
    %17 = arith.truncf %16 : vector<8x32xf32> to vector<8x32xbf16>
    %c0_12 = arith.constant 0 : index
    %c0_13 = arith.constant 0 : index
    %18 = vector.load %arg6[%c0_12, %c0_13] : memref<32x128xbf16, #tpu.memory_space<vmem>>, vector<32x128xbf16>
    %cst_14 = arith.constant dense<0.000000e+00> : vector<8x128xf32>
    %19 = tpu.matmul %17, %18, %cst_14 {dimension_numbers = #tpu.dot_dimension_numbers<[1], [0], [0], [1], [0, 0, 1, 1], [], []>} : vector<8x32xbf16>, vector<32x128xbf16>, vector<8x128xf32> -> vector<8x128xf32>
    %c0_15 = arith.constant 0 : index
    %c0_16 = arith.constant 0 : index
    %20 = vector.load %arg7[%c0_15, %c0_16] : memref<1x128xf32, #tpu.memory_space<vmem>>, vector<1x128xf32>
    %21 = vector.broadcast %20 : vector<1x128xf32> to vector<8x128xf32>
    %22 = arith.addf %19, %21 : vector<8x128xf32>
    %c0_17 = arith.constant 0 : index
    %c0_18 = arith.constant 0 : index
    %23 = vector.load %arg8[%c0_17, %c0_18] : memref<8x128xf32, #tpu.memory_space<vmem>>, vector<8x128xf32>
    tpu.vector_store %arg8[%c0_17, %c0_18], %22 {strides = array<i32>} : memref<8x128xf32, #tpu.memory_space<vmem>>, vector<8x128xf32>,
    return
  }
  func.func @transform_0(%arg0: i32) -> (i32, i32) {
    %c0_i32 = arith.constant 0 : i32
    %c0_i32_0 = arith.constant 0 : i32
    return %arg0, %c0_i32 : i32, i32
  }
  func.func @transform_1(%arg0: i32) -> (i32, i32) {
    %c0_i32 = arith.constant 0 : i32
    %c0_i32_0 = arith.constant 0 : i32
    %c0_i32_1 = arith.constant 0 : i32
    return %c0_i32, %c0_i32_0 : i32, i32
  }
  func.func @transform_2(%arg0: i32) -> (i32, i32) {
    %c0_i32 = arith.constant 0 : i32
    %c0_i32_0 = arith.constant 0 : i32
    %c0_i32_1 = arith.constant 0 : i32
    return %c0_i32, %c0_i32_0 : i32, i32
  }
  func.func @transform_3(%arg0: i32) -> (i32, i32) {
    %c0_i32 = arith.constant 0 : i32
    %c0_i32_0 = arith.constant 0 : i32
    %c0_i32_1 = arith.constant 0 : i32
    return %c0_i32, %c0_i32_0 : i32, i32
  }
  func.func @transform_4(%arg0: i32) -> (i32, i32) {
    %c0_i32 = arith.constant 0 : i32
    %c0_i32_0 = arith.constant 0 : i32
    %c0_i32_1 = arith.constant 0 : i32
    return %c0_i32, %c0_i32_0 : i32, i32
  }
  func.func @transform_5(%arg0: i32) -> (i32, i32) {
    %c0_i32 = arith.constant 0 : i32
    %c0_i32_0 = arith.constant 0 : i32
    %c0_i32_1 = arith.constant 0 : i32
    return %c0_i32, %c0_i32_0 : i32, i32
  }
  func.func @transform_6(%arg0: i32) -> (i32, i32) {
    %c0_i32 = arith.constant 0 : i32
    %c0_i32_0 = arith.constant 0 : i32
    %c0_i32_1 = arith.constant 0 : i32
    return %c0_i32, %c0_i32_0 : i32, i32
  }
  func.func @transform_7(%arg0: i32) -> (i32, i32) {
    %c0_i32 = arith.constant 0 : i32
    %c0_i32_0 = arith.constant 0 : i32
    return %arg0, %c0_i32 : i32, i32
  }
}

</mosaic_0001>

<llo_original>
// kernel: neural_net_forward.1
$region0: #{neural_net_forward.1}
  #allocation0 [shape = 'u32[]', space=smem, size = 0x4, offset = 0x4, fixed_abs, tag = 'smem constant byte address 0x4 - core index']
  #allocation1 [shape = 'u32[144,128]{1,0:T(1,128)}', space=vmem, size = 0x12000, scoped, tag = 'internal scratch']
  %s0 = inlined_call_operand.vmem [shape: f32[8,64], index: 0, kind: input, shape index: {}]
  %s1 = inlined_call_operand.vmem [shape: bf16[64,32], index: 1, kind: input, shape index: {}]
  %s2 = inlined_call_operand.vmem [shape: f32[1,32], index: 2, kind: input, shape index: {}]
  %s3 = inlined_call_operand.vmem [shape: bf16[32,32], index: 3, kind: input, shape index: {}]
  %s4 = inlined_call_operand.vmem [shape: f32[1,32], index: 4, kind: input, shape index: {}]
  %s5 = inlined_call_operand.vmem [shape: bf16[32,128], index: 5, kind: input, shape index: {}]
  %s6 = inlined_call_operand.vmem [shape: f32[1,128], index: 6, kind: input, shape index: {}]
  %s7 = inlined_call_operand.hbm [shape: f32[8,128], index: 7, kind: output, shape index: {}]
  %s8 = sld [smem:[#allocation0]]
  $region38: #{neural_net_forward.1} parent=0
    _
  %s10 = ssub.s32 1, %s8
  %s11 = scalar_select 0, %s10, %s8
  $region1: #{neural_net_forward.1} parent=0
    #allocation2 [shape = 'u8[4096]{0}', space=vmem, size = 0x1000, scoped, tag = 'output window, operand 0, single buffered']
    #allocation3 [shape = 's32[1]{0}', space=sflag, size = 0x4, scoped, tag = 'scoped memory for neural_net_forward.1']
    %12 = vsyncpa [#allocation3], 0
    // Predicated region
    $region2: #{neural_net_forward.1} parent=1 // pred_check
      _
    $region3: #{neural_net_forward.1} parent=1 // pred_check_branch
      %14 = sbr.rel (0) target = $region5
    $region4: #{neural_net_forward.1} parent=1 // pred_region
      _
    $region5: #{neural_net_forward.1} parent=1 // pred_fallthru
      _
    // Predicated region
    $region6: #{neural_net_forward.1} parent=1 // pred_check
      _
    $region7: #{neural_net_forward.1} parent=1 // pred_check_branch
      %16 = sbr.rel (0) target = $region9
    $region8: #{neural_net_forward.1} parent=1 // pred_region
      _
    $region9: #{neural_net_forward.1} parent=1 // pred_fallthru
      _
    // Predicated region
    $region10: #{neural_net_forward.1} parent=1 // pred_check
      _
    $region11: #{neural_net_forward.1} parent=1 // pred_check_branch
      %18 = sbr.rel (0) target = $region13
    $region12: #{neural_net_forward.1} parent=1 // pred_region
      _
    $region13: #{neural_net_forward.1} parent=1 // pred_fallthru
      _
    // Predicated region
    $region14: #{neural_net_forward.1} parent=1 // pred_check
      _
    $region15: #{neural_net_forward.1} parent=1 // pred_check_branch
      %20 = sbr.rel (0) target = $region17
    $region16: #{neural_net_forward.1} parent=1 // pred_region
      _
    $region17: #{neural_net_forward.1} parent=1 // pred_fallthru
      _
    // Predicated region
    $region18: #{neural_net_forward.1} parent=1 // pred_check
      _
    $region19: #{neural_net_forward.1} parent=1 // pred_check_branch
      %22 = sbr.rel (0) target = $region21
    $region20: #{neural_net_forward.1} parent=1 // pred_region
      _
    $region21: #{neural_net_forward.1} parent=1 // pred_fallthru
      _
    // Predicated region
    $region22: #{neural_net_forward.1} parent=1 // pred_check
      _
    $region23: #{neural_net_forward.1} parent=1 // pred_check_branch
      %24 = sbr.rel (0) target = $region25
    $region24: #{neural_net_forward.1} parent=1 // pred_region
      _
    $region25: #{neural_net_forward.1} parent=1 // pred_fallthru
      _
    // Predicated region
    $region26: #{neural_net_forward.1} parent=1 // pred_check
      _
    $region27: #{neural_net_forward.1} parent=1 // pred_check_branch
      %26 = sbr.rel (0) target = $region29
    $region28: #{neural_net_forward.1} parent=1 // pred_region
      _
    $region29: #{neural_net_forward.1} parent=1 // pred_fallthru
      _
    %v28 = vld [vmem:[%s0] sm:$0xff]
    %v29 = vpack.c.bf16 %v28, %v28
    %v30 = vld [vmem:[%s1] sm:$0xf]
    %v31 = vld [vmem:[%s1 + $0x4] sm:$0xf]
    %v32 = vld [vmem:[%s1 + $0x8] sm:$0xf]
    %v33 = vld [vmem:[%s1 + $0xc] sm:$0xf]
    %v34 = vld [vmem:[%s1 + $0x10] sm:$0xf]
    %v35 = vld [vmem:[%s1 + $0x14] sm:$0xf]
    %v36 = vld [vmem:[%s1 + $0x18] sm:$0xf]
    %v37 = vld [vmem:[%s1 + $0x1c] sm:$0xf]
    %v38 = vld [vmem:[%s2] sm:$0x1]
    %v40 = vlaneseq
    %v41 = vshrl.u32 %v40, 7
    %v42 = vsub.s32 0, %v41
    %v43 = vrot.slane %v38, %v42
    %v53 = vunpack.c.l.b16 %v30
    %v54 = vunpack.c.l.b16 %v31
    %v55 = vunpack.c.l.b16 %v32
    %v56 = vunpack.c.l.b16 %v33
    %v57 = vunpack.c.l.b16 %v34
    %v58 = vunpack.c.l.b16 %v35
    %v59 = vunpack.c.l.b16 %v36
    %v60 = vunpack.c.l.b16 %v37
    %v61 = vpack.c.b16 %v54, %v53
    %v62 = vpack.c.b16 %v56, %v55
    %v63 = vpack.c.b16 %v58, %v57
    %v64 = vpack.c.b16 %v60, %v59
    %vm69 = vcmask 523264
    %v71 = vsel %vm69, %v29, 0
    %73 = vmatprep.subr.bf16.mxu0 0
    %74 = vmatpush1.bf16.msra.mxu0 0
    %75 = vmatprep.subr.bf16.mxu0 0
    %76 = vmatpush1.bf16.msra.mxu0 0
    %77 = vmatprep.subr.bf16.mxu0 0
    %78 = vmatpush1.bf16.msra.mxu0 0
    %79 = vmatprep.subr.bf16.mxu0 0
    %80 = vmatpush1.bf16.msra.mxu0 0
    %81 = vmatprep.subr.bf16.mxu0 0
    %82 = vmatpush1.bf16.msra.mxu0 %v64
    %83 = vmatprep.subr.bf16.mxu0 0
    %84 = vmatpush1.bf16.msra.mxu0 %v63
    %85 = vmatprep.subr.bf16.mxu0 0
    %86 = vmatpush1.bf16.msra.mxu0 %v62
    %87 = vmatprep.subr.bf16.mxu0 0
    %88 = vmatpush1.bf16.msra.mxu0 %v61
    %89 = vmatprep.subr.bf16.mxu0 0
    %90 = vmatpush2.bf16.msra.mxu0 0
    %91 = vmatprep.subr.bf16.mxu0 0
    %92 = vmatpush2.bf16.msra.mxu0 0
    %93 = vmatprep.subr.bf16.mxu0 0
    %94 = vmatpush2.bf16.msra.mxu0 0
    %95 = vmatprep.subr.bf16.mxu0 0
    %96 = vmatpush2.bf16.msra.mxu0 0
    %97 = vmatprep.subr.bf16.mxu0 0
    %98 = vmatpush2.bf16.msra.mxu0 0
    %99 = vmatprep.subr.bf16.mxu0 0
    %100 = vmatpush2.bf16.msra.mxu0 0
    %101 = vmatprep.subr.bf16.mxu0 0
    %102 = vmatpush2.bf16.msra.mxu0 0
    %103 = vmatprep.subr.bf16.mxu0 0
    %104 = vmatpush2.bf16.msra.mxu0 0
    %105 = vmatprep.mubr.bf16.mxu0 0
    %106 = vmatmul.mubr.bf16.gmra.mxu0 %v71
    %v107 = vpop.f32.mrf.mxu0
    %v108 = vadd.f32 %v43, %v107
    %v109 = vpop.f32.mrf.mxu0
    %v110 = vpop.f32.mrf.mxu0
    %v111 = vpop.f32.mrf.mxu0
    %112 = vdwg.mxu0
    %v113 = vmax.f32 %v108, 0.0
    %v114 = vpack.c.bf16 %v113, %v113
    %v115 = vld [vmem:[%s3] sm:$0xf]
    %v116 = vld [vmem:[%s3 + $0x4] sm:$0xf]
    %v117 = vld [vmem:[%s3 + $0x8] sm:$0xf]
    %v118 = vld [vmem:[%s3 + $0xc] sm:$0xf]
    %v119 = vld [vmem:[%s4] sm:$0x1]
    %v121 = vlaneseq
    %v122 = vshrl.u32 %v121, 7
    %v123 = vsub.s32 0, %v122
    %v124 = vrot.slane %v119, %v123
    %v130 = vunpack.c.l.b16 %v115
    %v131 = vunpack.c.l.b16 %v116
    %v132 = vunpack.c.l.b16 %v117
    %v133 = vunpack.c.l.b16 %v118
    %v134 = vpack.c.b16 %v131, %v130
    %v135 = vpack.c.b16 %v133, %v132
    %vm138 = vcmask 261120
    %v140 = vsel %vm138, %v114, 0
    %142 = vmatprep.subr.bf16.mxu0 0
    %143 = vmatpush1.bf16.msra.mxu0 0
    %144 = vmatprep.subr.bf16.mxu0 0
    %145 = vmatpush1.bf16.msra.mxu0 0
    %146 = vmatprep.subr.bf16.mxu0 0
    %147 = vmatpush1.bf16.msra.mxu0 0
    %148 = vmatprep.subr.bf16.mxu0 0
    %149 = vmatpush1.bf16.msra.mxu0 0
    %150 = vmatprep.subr.bf16.mxu0 0
    %151 = vmatpush1.bf16.msra.mxu0 0
    %152 = vmatprep.subr.bf16.mxu0 0
    %153 = vmatpush1.bf16.msra.mxu0 0
    %154 = vmatprep.subr.bf16.mxu0 0
    %155 = vmatpush1.bf16.msra.mxu0 %v135
    %156 = vmatprep.subr.bf16.mxu0 0
    %157 = vmatpush1.bf16.msra.mxu0 %v134
    %158 = vmatprep.subr.bf16.mxu0 0
    %159 = vmatpush2.bf16.msra.mxu0 0
    %160 = vmatprep.subr.bf16.mxu0 0
    %161 = vmatpush2.bf16.msra.mxu0 0
    %162 = vmatprep.subr.bf16.mxu0 0
    %163 = vmatpush2.bf16.msra.mxu0 0
    %164 = vmatprep.subr.bf16.mxu0 0
    %165 = vmatpush2.bf16.msra.mxu0 0
    %166 = vmatprep.subr.bf16.mxu0 0
    %167 = vmatpush2.bf16.msra.mxu0 0
    %168 = vmatprep.subr.bf16.mxu0 0
    %169 = vmatpush2.bf16.msra.mxu0 0
    %170 = vmatprep.subr.bf16.mxu0 0
    %171 = vmatpush2.bf16.msra.mxu0 0
    %172 = vmatprep.subr.bf16.mxu0 0
    %173 = vmatpush2.bf16.msra.mxu0 0
    %174 = vmatprep.mubr.bf16.mxu0 0
    %175 = vmatmul.mubr.bf16.gmra.mxu0 %v140
    %v176 = vpop.f32.mrf.mxu0
    %v177 = vadd.f32 %v124, %v176
    %v178 = vpop.f32.mrf.mxu0
    %v179 = vpop.f32.mrf.mxu0
    %v180 = vpop.f32.mrf.mxu0
    %181 = vdwg.mxu0
    %v182 = vmax.f32 %v177, 0.0
    %v183 = vpack.c.bf16 %v182, %v182
    %v184 = vld [vmem:[%s5] sm:$0xf]
    %v185 = vld [vmem:[%s5 + $0x4] sm:$0xf]
    %v186 = vld [vmem:[%s5 + $0x8] sm:$0xf]
    %v187 = vld [vmem:[%s5 + $0xc] sm:$0xf]
    %v188 = vld [vmem:[%s6] sm:$0x1]
    %v190 = vlaneseq
    %v191 = vshrl.u32 %v190, 7
    %v192 = vsub.s32 0, %v191
    %v193 = vrot.slane %v188, %v192
    %v199 = vunpack.c.l.b16 %v184
    %v200 = vunpack.c.l.b16 %v185
    %v201 = vunpack.c.l.b16 %v186
    %v202 = vunpack.c.l.b16 %v187
    %v203 = vpack.c.b16 %v200, %v199
    %v204 = vpack.c.b16 %v202, %v201
    %v208 = vsel %vm138, %v183, 0
    %210 = vmatprep.subr.bf16.mxu0 0
    %211 = vmatpush1.bf16.msra.mxu0 0
    %212 = vmatprep.subr.bf16.mxu0 0
    %213 = vmatpush1.bf16.msra.mxu0 0
    %214 = vmatprep.subr.bf16.mxu0 0
    %215 = vmatpush1.bf16.msra.mxu0 0
    %216 = vmatprep.subr.bf16.mxu0 0
    %217 = vmatpush1.bf16.msra.mxu0 0
    %218 = vmatprep.subr.bf16.mxu0 0
    %219 = vmatpush1.bf16.msra.mxu0 0
    %220 = vmatprep.subr.bf16.mxu0 0
    %221 = vmatpush1.bf16.msra.mxu0 0
    %222 = vmatprep.subr.bf16.mxu0 0
    %223 = vmatpush1.bf16.msra.mxu0 %v204
    %224 = vmatprep.subr.bf16.mxu0 0
    %225 = vmatpush1.bf16.msra.mxu0 %v203
    %226 = vmatprep.subr.bf16.mxu0 0
    %227 = vmatpush2.bf16.msra.mxu0 0
    %228 = vmatprep.subr.bf16.mxu0 0
    %229 = vmatpush2.bf16.msra.mxu0 0
    %230 = vmatprep.subr.bf16.mxu0 0
    %231 = vmatpush2.bf16.msra.mxu0 0
    %232 = vmatprep.subr.bf16.mxu0 0
    %233 = vmatpush2.bf16.msra.mxu0 0
    %234 = vmatprep.subr.bf16.mxu0 0
    %235 = vmatpush2.bf16.msra.mxu0 0
    %236 = vmatprep.subr.bf16.mxu0 0
    %237 = vmatpush2.bf16.msra.mxu0 0
    %238 = vmatprep.subr.bf16.mxu0 0
    %239 = vmatpush2.bf16.msra.mxu0 0
    %240 = vmatprep.subr.bf16.mxu0 0
    %241 = vmatpush2.bf16.msra.mxu0 0
    %242 = vmatprep.mubr.bf16.mxu0 0
    %243 = vmatmul.mubr.bf16.gmra.mxu0 %v208
    %v244 = vpop.f32.mrf.mxu0
    %v245 = vadd.f32 %v193, %v244
    %v246 = vpop.f32.mrf.mxu0
    %v247 = vpop.f32.mrf.mxu0
    %v248 = vpop.f32.mrf.mxu0
    %249 = vdwg.mxu0
    %250 = vst [vmem:[#allocation2] sm:$0xff] %v245
    // Predicated region
    $region30: #{neural_net_forward.1} parent=1 // pred_check
      _
    $region31: #{neural_net_forward.1} parent=1 // pred_check_branch
      %252 = sbr.rel (0) target = $region33
    $region32: #{neural_net_forward.1} parent=1 // pred_region
      %s254 = ssub.s32 128, 128
      %255 = vsyncadd [#allocation3], %s254
      %s257 = sshll.u32 [#allocation2], 4
      %s258 = int_to_ptr.vmem [resolvable:$true] %s257
      %260 = dma.vmem_to_hbm [thread:$0]  %s258, 128, %s7, [#allocation3]
    $region33: #{neural_net_forward.1} parent=1 // pred_fallthru
      _
    // Predicated region
    $region34: #{neural_net_forward.1} parent=1 // pred_check
      _
    $region35: #{neural_net_forward.1} parent=1 // pred_check_branch
      %262 = sbr.rel (0) target = $region37
    $region36: #{neural_net_forward.1} parent=1 // pred_region
      %263 = dma.done [#allocation3], 128
    $region37: #{neural_net_forward.1} parent=1 // pred_fallthru
      _
    %264 = vsyncpa [#allocation3], 1

</llo_original>
